<compile_context>
chip_gen: v6e
topology: v6e:2x2x1
jax: 0.10.0
libtpu: 0.0.40
codegen_flags: <defaults>
</compile_context>

<pallas_src>
import math

import jax
import jax.numpy as jnp
from jax.experimental import pallas as pl
from jax.experimental.pallas import tpu as pltpu

_LANE = 128


def _fermi_dirac_kernel(params_ref, dist_ref, out_ref):
    # params_ref (SMEM): [1/t, -r/t] -- free scalar-slot reads.
    inv_t = params_ref[0]
    bias = params_ref[1]
    x = dist_ref[...].astype(jnp.float32)
    z = jnp.minimum(x * inv_t + bias, 50.0)          # clamp_max(50.0), torch parity
    probs = jax.nn.sigmoid(-z)                       # == 1/(exp(z)+1), single EUP op
    out_ref[...] = probs.astype(out_ref.dtype)


def _vmem_config():
    """Return (per-tile VMEM budget bytes, compiler vmem_limit_bytes) for this chip."""
    try:
        cap = int(pltpu.get_tpu_info().vmem_capacity_bytes)
    except Exception:
        cap = 64 << 20                               # assume v7x-sized if unknown
    if cap >= (100 << 20):                           # v5e / v6e: 128 MiB VMEM
        return 64 << 20, 96 << 20
    return 24 << 20, 48 << 20                        # v7x-class: 64 MiB VMEM


def _fermi_dirac_2d(slab, params, *, max_tile_m=4096):
    """Run the kernel over a lane-dense 2D slab (rows, C)."""
    M, N = slab.shape
    itemsize = jnp.dtype(slab.dtype).itemsize
    vmem_budget, vmem_limit = _vmem_config()

    # Double-buffered in + out tiles plus f32 compute temps.
    per_row_bytes = N * (4 * itemsize + 8)
    tm_budget = max(1, vmem_budget // per_row_bytes)
    tm = min(M, max_tile_m, tm_budget)
    if M >= 16:
        # Keep >= 2 grid steps: lets the "parallel" axis split across v7x's two
        # TensorCores and gives the pipeline something to overlap.
        tm = min(tm, pl.cdiv(M, 2))
    if tm < M:
        tm = max(8, (tm // 8) * 8)                   # sublane-aligned tiles
    grid_m = pl.cdiv(M, tm)

    cost = pl.CostEstimate(
        flops=3 * M * N,
        transcendentals=M * N,
        bytes_accessed=2 * M * N * itemsize + 8,
    )

    return pl.pallas_call(
        _fermi_dirac_kernel,
        out_shape=jax.ShapeDtypeStruct((M, N), slab.dtype),
        grid=(grid_m,),
        in_specs=[
            pl.BlockSpec(memory_space=pltpu.MemorySpace.SMEM),   # [1/t, -r/t]
            pl.BlockSpec((tm, N), lambda i: (i, 0)),
        ],
        out_specs=pl.BlockSpec((tm, N), lambda i: (i, 0)),
        compiler_params=pltpu.CompilerParams(
            dimension_semantics=("parallel",),
            vmem_limit_bytes=vmem_limit,
        ),
        cost_estimate=cost,
    )(params, slab)


def _pick_lane_width(total):
    """Slab width: multiple of 128, aims for >= 8 rows, capped at 2048 lanes."""
    c = _LANE * max(1, math.ceil(math.ceil(total / 8) / _LANE))
    return int(min(2048, c))


def fermi_dirac_decoder(dist, r, t, *, max_tile_m=4096):
    """Fermi-Dirac edge probabilities, elementwise over any input shape."""
    # Fold module params into [1/t, -r/t] with jnp math (works for traced r, t).
    t_f = jnp.asarray(t, jnp.float32)
    r_f = jnp.asarray(r, jnp.float32)
    params = jnp.stack([1.0 / t_f, -r_f / t_f])

    orig_shape = dist.shape
    total = int(math.prod(orig_shape))
    d = dist.reshape((1, 1)) if dist.ndim == 0 else dist

    # Fast path: trailing dim already lane-dense -> no repack copy.
    n_last = d.shape[-1]
    if d.ndim >= 2 and n_last % _LANE == 0 and n_last <= 8192:
        out = _fermi_dirac_2d(d.reshape(-1, n_last), params, max_tile_m=max_tile_m)
        return out.reshape(orig_shape)

    # General path (1-D inputs, odd / small trailing dims, very wide rows):
    # flatten, pack into a lane-dense (rows, C) slab, pad the tail.
    c = _pick_lane_width(total)
    rows = pl.cdiv(total, c)
    if rows > 1:
        rows = pl.cdiv(rows, 8) * 8                  # sublane-align row count
    padded = rows * c
    flat = d.reshape(-1)
    if padded != total:
        flat = jnp.pad(flat, (0, padded - total))    # pad value 0 is harmless
    out = _fermi_dirac_2d(flat.reshape(rows, c), params, max_tile_m=max_tile_m)
    return out.reshape(-1)[:total].reshape(orig_shape)


def _reference(dist, r, t):
    # Mirrors the PyTorch forward exactly.
    return 1.0 / (jnp.exp(jnp.minimum((dist - r) / t, 50.0)) + 1.0)


if __name__ == "__main__":
    key = jax.random.PRNGKey(0)

    # Module parameters: FermiDiracDecoder(r, t)
    r, t = 2.0, 1.0

    # 1) Pairwise-distance style 2D input, lane-dense trailing dim.
    d1 = jax.random.uniform(key, (128, 256), dtype=jnp.float32,
                            minval=0.0, maxval=10.0)
    o1 = jax.block_until_ready(fermi_dirac_decoder(d1, r, t))
    assert o1.shape == d1.shape and o1.dtype == d1.dtype
    assert jnp.allclose(o1, _reference(d1, r, t), atol=1e-5, rtol=1e-5)

    # 2) Odd, non-128-multiple shape -> repacked into a lane-dense slab.
    d2 = jax.random.uniform(jax.random.PRNGKey(1), (37, 200),
                            dtype=jnp.float32, minval=0.0, maxval=10.0)
    o2 = jax.block_until_ready(fermi_dirac_decoder(d2, 1.5, 0.5))
    assert o2.shape == d2.shape
    assert jnp.allclose(o2, _reference(d2, 1.5, 0.5), atol=1e-5, rtol=1e-5)

    # 3) 1-D edge-distance vector (typical link-prediction use).
    d3 = jax.random.uniform(jax.random.PRNGKey(2), (5000,),
                            dtype=jnp.float32, minval=0.0, maxval=10.0)
    o3 = jax.block_until_ready(fermi_dirac_decoder(d3, 2.0, 1.0))
    assert o3.shape == d3.shape
    assert jnp.allclose(o3, _reference(d3, 2.0, 1.0), atol=1e-5, rtol=1e-5)

    # 4) Works under jit with traced (learned) r, t.
    jit_fn = jax.jit(fermi_dirac_decoder)
    o4 = jax.block_until_ready(
        jit_fn(d1, jnp.asarray(2.0, jnp.float32), jnp.asarray(1.0, jnp.float32)))
    assert jnp.allclose(o4, _reference(d1, 2.0, 1.0), atol=1e-5, rtol=1e-5)

    print("KERNEL_OK")
</pallas_src>

<mosaic_0001>
module attributes {stable_mosaic.version = 11 : i64} {
  func.func @_fermi_dirac_kernel(%arg0: i32, %arg1: memref<2xf32, #tpu.memory_space<smem>>, %arg2: memref<64x256xf32, #tpu.memory_space<vmem>>, %arg3: memref<64x256xf32, #tpu.memory_space<vmem>>) attributes {dimension_semantics = [#tpu.dimension_semantics<parallel>], iteration_bounds = array<i64: 2>, scalar_prefetch = 0 : i64, scratch_operands = 0 : i64, tpu.core_type = #tpu.core_type<tc>, window_params = [{transform_indices = @transform_0, window_bounds = array<i64: 2>}, {transform_indices = @transform_1, window_bounds = array<i64: 64, 256>}, {transform_indices = @transform_2, window_bounds = array<i64: 64, 256>}]} {
    %c0 = arith.constant 0 : index
    %0 = memref.load %arg1[%c0] : memref<2xf32, #tpu.memory_space<smem>>
    %c1 = arith.constant 1 : index
    %1 = memref.load %arg1[%c1] : memref<2xf32, #tpu.memory_space<smem>>
    %c0_0 = arith.constant 0 : index
    %c0_1 = arith.constant 0 : index
    %2 = vector.load %arg2[%c0_0, %c0_1] : memref<64x256xf32, #tpu.memory_space<vmem>>, vector<64x256xf32>
    %3 = vector.broadcast %0 : f32 to vector<64x256xf32>
    %4 = arith.mulf %2, %3 : vector<64x256xf32>
    %5 = vector.broadcast %1 : f32 to vector<64x256xf32>
    %6 = arith.addf %4, %5 : vector<64x256xf32>
    %cst = arith.constant 5.000000e+01 : f32
    %7 = vector.broadcast %cst : f32 to vector<64x256xf32>
    %8 = arith.minimumf %6, %7 : vector<64x256xf32>
    %cst_2 = arith.constant 0.000000e+00 : f32
    %9 = vector.broadcast %cst_2 : f32 to vector<64x256xf32>
    %10 = arith.subf %9, %8 : vector<64x256xf32>
    %11 = arith.negf %10 : vector<64x256xf32>
    %12 = math.exp %11 : vector<64x256xf32>
    %cst_3 = arith.constant 1.000000e+00 : f32
    %13 = vector.broadcast %cst_3 : f32 to vector<64x256xf32>
    %14 = arith.addf %13, %12 : vector<64x256xf32>
    %15 = arith.divf %13, %14 : vector<64x256xf32>
    %c0_4 = arith.constant 0 : index
    %c0_5 = arith.constant 0 : index
    %16 = vector.load %arg3[%c0_4, %c0_5] : memref<64x256xf32, #tpu.memory_space<vmem>>, vector<64x256xf32>
    tpu.vector_store %arg3[%c0_4, %c0_5], %15 {strides = array<i32>} : memref<64x256xf32, #tpu.memory_space<vmem>>, vector<64x256xf32>,
    return
  }
  func.func @transform_0(%arg0: i32) -> i32 {
    %c0_i32 = arith.constant 0 : i32
    %c0_i32_0 = arith.constant 0 : i32
    return %c0_i32 : i32
  }
  func.func @transform_1(%arg0: i32) -> (i32, i32) {
    %c0_i32 = arith.constant 0 : i32
    %c0_i32_0 = arith.constant 0 : i32
    return %arg0, %c0_i32 : i32, i32
  }
  func.func @transform_2(%arg0: i32) -> (i32, i32) {
    %c0_i32 = arith.constant 0 : i32
    %c0_i32_0 = arith.constant 0 : i32
    return %arg0, %c0_i32 : i32, i32
  }
}

</mosaic_0001>

<llo_original>
// kernel: tpu_custom_call.1
$region0: #{tpu_custom_call.1}
  #allocation0 [shape = 'u32[]', space=smem, size = 0x4, offset = 0x4, fixed_abs, tag = 'smem constant byte address 0x4 - core index']
  #allocation1 [shape = 'u32[144,128]{1,0:T(1,128)}', space=vmem, size = 0x12000, scoped, tag = 'internal scratch']
  %s0 = inlined_call_operand.hbm [shape: f32[2], index: 0, kind: input, shape index: {}]
  %s1 = inlined_call_operand.hbm [shape: f32[128,256], index: 1, kind: input, shape index: {}]
  %s2 = inlined_call_operand.hbm [shape: f32[128,256], index: 2, kind: output, shape index: {}]
  %s3 = sld [smem:[#allocation0]]
  $region49: #{tpu_custom_call.1} parent=0
    _
  %s5 = ssub.s32 1, %s3
  %s6 = scalar_select 0, %s5, %s3
  $region1: #{tpu_custom_call.1} parent=0
    #allocation2 [shape = 'u8[512]{0}', space=smem, size = 0x200, scoped, tag = 'input window, operand 0, single buffered']
    #allocation3 [shape = 's32[2]{0}', space=sflag, size = 0x8, scoped, tag = 'scoped memory for tpu_custom_call.1']
    #allocation4 [shape = 's32[2]{0}', space=sflag, size = 0x8, scoped, tag = 'scoped memory for tpu_custom_call.1']
    #allocation5 [shape = 's32[2]{0}', space=sflag, size = 0x8, scoped, tag = 'scoped memory for tpu_custom_call.1']
    #allocation6 [shape = 'u8[131072]{0}', space=vmem, size = 0x20000, scoped, tag = 'input window, operand 1']
    #allocation7 [shape = 'u8[131072]{0}', space=vmem, size = 0x20000, scoped, tag = 'output window, operand 0']
    %7 = vsyncpa [#allocation5], 0
    %8 = vsyncpa [#allocation3], 0
    %s9 = scalar_lea.sflag [#allocation3], 1
    %10 = vsyncpa %s9, 0
    %11 = vsyncpa [#allocation4], 0
    %s12 = scalar_lea.sflag [#allocation4], 1
    %13 = vsyncpa %s12, 0
    loop: start=0, step=1, limit=4
    $region2: #{tpu_custom_call.1} parent=1 // loop_pre_header
      _
    $region3: #{tpu_custom_call.1} parent=1 // loop_header
      %s15 = sphi 0, %s19
      %p16 = scmp.ge.s32.totalorder %s15, 4
      %s23 = sphi 0, %s23
      %s25 = sphi 0, %s23
      %s26 = sphi 0, %s25
      %s40 = sphi 0, %s26
      %s46 = sphi 0, %s48
      %s49 = sphi 0, %s46
      %s50 = sphi 0, %s49
      %s66 = sphi 0, %s50
      %s72 = sphi 0, %s74
      %s75 = sphi 0, %s72
      %s76 = sphi 0, %s75
      %s92 = sphi 0, %s76
    $region4: #{tpu_custom_call.1} parent=1 // loop_header_branch
      %18 = sbr.rel (%p16) target = $region8
    $region5: #{tpu_custom_call.1} parent=1 // loop_body
      %s20 = ssub.s32 %s15, 1
      %s21 = ssub.s32 %s15, 2
      %s22 = sadd.s32 %s15, 1
      %s24 = sadd.s32 %s23, 1
      %p27 = scmp.eq.s32.totalorder %s15, 1
      %p28 = scmp.ne.s32.totalorder %s23, %s25
      %p29 = scmp.eq.s32.totalorder %s15, 0
      %p30 = por %p28, %p29
      %p31 = scmp.ne.s32.totalorder %s23, %s25
      %p32 = scmp.eq.s32.totalorder %s20, 1
      %p33 = por %p31, %p32
      %p34 = scmp.ne.s32.totalorder %s25, %s26
      %p35 = scmp.eq.s32.totalorder %s20, 0
      %p36 = por %p34, %p35
      %p37 = scmp.ne.s32.totalorder %s25, %s26
      %p38 = scmp.eq.s32.totalorder %s21, 1
      %p39 = por %p37, %p38
      %p41 = scmp.ne.s32.totalorder %s26, %s40
      %p42 = scmp.eq.s32.totalorder %s21, 0
      %p43 = por %p41, %p42
      %s44 = ssub.s32 %s15, %s22
      %p45 = scmp.eq.s32.totalorder %s44, 0
      %s47 = sadd.s32 %s46, 1
      %s48 = scalar_select %p45, %s46, %s47
      %p51 = pneg %p45
      %p52 = scmp.eq.s32.totalorder %s15, 1
      %p53 = por %p51, %p52
      %p54 = scmp.ne.s32.totalorder %s46, %s49
      %p55 = scmp.eq.s32.totalorder %s15, 0
      %p56 = por %p54, %p55
      %p57 = scmp.ne.s32.totalorder %s46, %s49
      %p58 = scmp.eq.s32.totalorder %s20, 1
      %p59 = por %p57, %p58
      %p60 = scmp.ne.s32.totalorder %s49, %s50
      %p61 = scmp.eq.s32.totalorder %s20, 0
      %p62 = por %p60, %p61
      %p63 = scmp.ne.s32.totalorder %s49, %s50
      %p64 = scmp.eq.s32.totalorder %s21, 1
      %p65 = por %p63, %p64
      %p67 = scmp.ne.s32.totalorder %s50, %s66
      %p68 = scmp.eq.s32.totalorder %s21, 0
      %p69 = por %p67, %p68
      %s70 = ssub.s32 %s15, %s22
      %p71 = scmp.eq.s32.totalorder %s70, 0
      %s73 = sadd.s32 %s72, 1
      %s74 = scalar_select %p71, %s72, %s73
      %p77 = pneg %p71
      %p78 = scmp.eq.s32.totalorder %s15, 1
      %p79 = por %p77, %p78
      %p80 = scmp.ne.s32.totalorder %s72, %s75
      %p81 = scmp.eq.s32.totalorder %s15, 0
      %p82 = por %p80, %p81
      %p83 = scmp.ne.s32.totalorder %s72, %s75
      %p84 = scmp.eq.s32.totalorder %s20, 1
      %p85 = por %p83, %p84
      %p86 = scmp.ne.s32.totalorder %s75, %s76
      %p87 = scmp.eq.s32.totalorder %s20, 0
      %p88 = por %p86, %p87
      %p89 = scmp.ne.s32.totalorder %s75, %s76
      %p90 = scmp.eq.s32.totalorder %s21, 1
      %p91 = por %p89, %p90
      %p93 = scmp.ne.s32.totalorder %s76, %s92
      %p94 = scmp.eq.s32.totalorder %s21, 0
      %p95 = por %p93, %p94
      %p96 = scmp.le.s32.totalorder 1, %s15
      %p97 = scmp.lt.s32.totalorder %s15, 3
      %p98 = pnand %p96, %p97
      %p99 = pneg %p98
      // Predicated region
      $region9: #{tpu_custom_call.1} parent=5 // pred_check
        _
      $region10: #{tpu_custom_call.1} parent=5 // pred_check_branch
        %101 = sbr.rel (%p98) target = $region12
      $region11: #{tpu_custom_call.1} parent=5 // pred_region
        %s102 = ssub.s32 %s15, 1
        // Predicated region
        $region13: #{tpu_custom_call.1} parent=11 // pred_check
          %p103 = pneg %p36
        $region14: #{tpu_custom_call.1} parent=11 // pred_check_branch
          %105 = sbr.rel (%p103) target = $region16
        $region15: #{tpu_custom_call.1} parent=11 // pred_region
          %s107 = ssub.s32 16, 16
          %108 = vsyncadd [#allocation5], %s107
          %111 = dma.hbm_to_smem %s0, 16, [#allocation2], [#allocation5]
        $region16: #{tpu_custom_call.1} parent=11 // pred_fallthru
          _
      $region12: #{tpu_custom_call.1} parent=5 // pred_fallthru
        _
      %p112 = scmp.lt.s32.totalorder %s15, 2
      // Predicated region
      $region17: #{tpu_custom_call.1} parent=5 // pred_check
        %p113 = pneg %p112
      $region18: #{tpu_custom_call.1} parent=5 // pred_check_branch
        %115 = sbr.rel (%p113) target = $region20
      $region19: #{tpu_custom_call.1} parent=5 // pred_region
        // Predicated region
        $region21: #{tpu_custom_call.1} parent=19 // pred_check
          %p116 = pneg %p56
        $region22: #{tpu_custom_call.1} parent=19 // pred_check_branch
          %118 = sbr.rel (%p116) target = $region24
        $region23: #{tpu_custom_call.1} parent=19 // pred_region
          %s119 = sand.u32 %s46, 1
          %s120 = scalar_lea.sflag [#allocation3], %s119
          %s121 = sand.u32 %s46, 1
          %s122 = smul.addr %s121, 128
          %s123 = scalar_lea.vmem [#allocation6], %s122
          %s124 = smul.u32 8, %s15
          %s126 = ssub.s32 2048, 2048
          %127 = vsyncadd %s120, %s126
          %s128 = smul.addr %s124, 2
          %s129 = smul.addr %s128, 128
          %s130 = scalar_lea.hbm %s1, %s129
          %s131 = sshll.u32 %s123, 4
          %s132 = int_to_ptr.vmem [resolvable:$true] %s131
          %137 = dma.hbm_to_vmem [thread:$0]  %s130, 2048, %s132, %s120, 256, 256, 16
        $region24: #{tpu_custom_call.1} parent=19 // pred_fallthru
          _
      $region20: #{tpu_custom_call.1} parent=5 // pred_fallthru
        _
      %p138 = scmp.le.s32.totalorder 1, %s15
      %p139 = scmp.lt.s32.totalorder %s15, 3
      %p140 = pnand %p138, %p139
      %p141 = pneg %p140
      // Predicated region
      $region25: #{tpu_custom_call.1} parent=5 // pred_check
        _
      $region26: #{tpu_custom_call.1} parent=5 // pred_check_branch
        %143 = sbr.rel (%p140) target = $region28
      $region27: #{tpu_custom_call.1} parent=5 // pred_region
        %s144 = ssub.s32 %s15, 1
        // Predicated region
        $region29: #{tpu_custom_call.1} parent=27 // pred_check
          %p145 = pneg %p36
        $region30: #{tpu_custom_call.1} parent=27 // pred_check_branch
          %147 = sbr.rel (%p145) target = $region32
        $region31: #{tpu_custom_call.1} parent=27 // pred_region
          %148 = dma.done [#allocation5], 16
        $region32: #{tpu_custom_call.1} parent=27 // pred_fallthru
          _
        %s149 = sand.u32 %s49, 1
        %s150 = scalar_lea.sflag [#allocation3], %s149
        %s151 = sand.u32 %s49, 1
        %s152 = smul.addr %s151, 128
        %s153 = scalar_lea.vmem [#allocation6], %s152
        // Predicated region
        $region33: #{tpu_custom_call.1} parent=27 // pred_check
          %p154 = pneg %p62
        $region34: #{tpu_custom_call.1} parent=27 // pred_check_branch
          %156 = sbr.rel (%p154) target = $region36
        $region35: #{tpu_custom_call.1} parent=27 // pred_region
          %157 = dma.done %s150, 2048
        $region36: #{tpu_custom_call.1} parent=27 // pred_fallthru
          _
        %158 = sfence
        %p159 = pneg %p36
        %p160 = pneg %p33
        %s161 = sand.u32 %s49, 1
        %s162 = scalar_lea.sflag [#allocation3], %s161
        %s163 = sand.u32 %s49, 1
        %s164 = smul.addr %s163, 128
        %s165 = scalar_lea.vmem [#allocation6], %s164
        %p166 = pneg %p62
        %p167 = pneg %p59
        %p168 = pneg %p88
        %p169 = pneg %p85
        %s170 = sand.u32 %s75, 1
        %s171 = scalar_lea.sflag [#allocation4], %s170
        %s172 = sand.u32 %s75, 1
        %s173 = smul.addr %s172, 128
        %s174 = scalar_lea.vmem [#allocation7], %s173
        %s175 = smul.u32 8, %s20
        %s176 = smul.u32 8, %s20
        %s177 = sld [smem:[#allocation2]]
        %s178 = sld [smem:[#allocation2 + $0x1]]
        %v179 = vld [vmem:[%s153] sm:$0xff]
        %v180 = vld [vmem:[%s153 + $0x8] sm:$0xff]
        %v181 = vld [vmem:[%s153 + $0x10] sm:$0xff]
        %v182 = vld [vmem:[%s153 + $0x18] sm:$0xff]
        %v183 = vld [vmem:[%s153 + $0x20] sm:$0xff]
        %v184 = vld [vmem:[%s153 + $0x28] sm:$0xff]
        %v185 = vld [vmem:[%s153 + $0x30] sm:$0xff]
        %v186 = vld [vmem:[%s153 + $0x38] sm:$0xff]
        %v187 = vld [vmem:[%s153 + $0x40] sm:$0xff]
        %v188 = vld [vmem:[%s153 + $0x48] sm:$0xff]
        %v189 = vld [vmem:[%s153 + $0x50] sm:$0xff]
        %v190 = vld [vmem:[%s153 + $0x58] sm:$0xff]
        %v191 = vld [vmem:[%s153 + $0x60] sm:$0xff]
        %v192 = vld [vmem:[%s153 + $0x68] sm:$0xff]
        %v193 = vld [vmem:[%s153 + $0x70] sm:$0xff]
        %v194 = vld [vmem:[%s153 + $0x78] sm:$0xff]
        %v195 = vstv %s177
        %v196 = vmul.f32 %v179, %v195
        %v197 = vmul.f32 %v180, %v195
        %v198 = vmul.f32 %v181, %v195
        %v199 = vmul.f32 %v182, %v195
        %v200 = vmul.f32 %v183, %v195
        %v201 = vmul.f32 %v184, %v195
        %v202 = vmul.f32 %v185, %v195
        %v203 = vmul.f32 %v186, %v195
        %v204 = vmul.f32 %v187, %v195
        %v205 = vmul.f32 %v188, %v195
        %v206 = vmul.f32 %v189, %v195
        %v207 = vmul.f32 %v190, %v195
        %v208 = vmul.f32 %v191, %v195
        %v209 = vmul.f32 %v192, %v195
        %v210 = vmul.f32 %v193, %v195
        %v211 = vmul.f32 %v194, %v195
        %v212 = vstv %s178
        %v213 = vadd.f32 %v196, %v212
        %v214 = vadd.f32 %v197, %v212
        %v215 = vadd.f32 %v198, %v212
        %v216 = vadd.f32 %v199, %v212
        %v217 = vadd.f32 %v200, %v212
        %v218 = vadd.f32 %v201, %v212
        %v219 = vadd.f32 %v202, %v212
        %v220 = vadd.f32 %v203, %v212
        %v221 = vadd.f32 %v204, %v212
        %v222 = vadd.f32 %v205, %v212
        %v223 = vadd.f32 %v206, %v212
        %v224 = vadd.f32 %v207, %v212
        %v225 = vadd.f32 %v208, %v212
        %v226 = vadd.f32 %v209, %v212
        %v227 = vadd.f32 %v210, %v212
        %v228 = vadd.f32 %v211, %v212
        %v229 = vmin.f32 %v213, 50.0
        %v230 = vmin.f32 %v214, 50.0
        %v231 = vmin.f32 %v215, 50.0
        %v232 = vmin.f32 %v216, 50.0
        %v233 = vmin.f32 %v217, 50.0
        %v234 = vmin.f32 %v218, 50.0
        %v235 = vmin.f32 %v219, 50.0
        %v236 = vmin.f32 %v220, 50.0
        %v237 = vmin.f32 %v221, 50.0
        %v238 = vmin.f32 %v222, 50.0
        %v239 = vmin.f32 %v223, 50.0
        %v240 = vmin.f32 %v224, 50.0
        %v241 = vmin.f32 %v225, 50.0
        %v242 = vmin.f32 %v226, 50.0
        %v243 = vmin.f32 %v227, 50.0
        %v244 = vmin.f32 %v228, 50.0
        %v245 = vsub.f32 0.0, %v229
        %v246 = vsub.f32 0.0, %v230
        %v247 = vsub.f32 0.0, %v231
        %v248 = vsub.f32 0.0, %v232
        %v249 = vsub.f32 0.0, %v233
        %v250 = vsub.f32 0.0, %v234
        %v251 = vsub.f32 0.0, %v235
        %v252 = vsub.f32 0.0, %v236
        %v253 = vsub.f32 0.0, %v237
        %v254 = vsub.f32 0.0, %v238
        %v255 = vsub.f32 0.0, %v239
        %v256 = vsub.f32 0.0, %v240
        %v257 = vsub.f32 0.0, %v241
        %v258 = vsub.f32 0.0, %v242
        %v259 = vsub.f32 0.0, %v243
        %v260 = vsub.f32 0.0, %v244
        %v261 = vxor.u32 %v245, 2147483648
        %v262 = vxor.u32 %v246, 2147483648
        %v263 = vxor.u32 %v247, 2147483648
        %v264 = vxor.u32 %v248, 2147483648
        %v265 = vxor.u32 %v249, 2147483648
        %v266 = vxor.u32 %v250, 2147483648
        %v267 = vxor.u32 %v251, 2147483648
        %v268 = vxor.u32 %v252, 2147483648
        %v269 = vxor.u32 %v253, 2147483648
        %v270 = vxor.u32 %v254, 2147483648
        %v271 = vxor.u32 %v255, 2147483648
        %v272 = vxor.u32 %v256, 2147483648
        %v273 = vxor.u32 %v257, 2147483648
        %v274 = vxor.u32 %v258, 2147483648
        %v275 = vxor.u32 %v259, 2147483648
        %v276 = vxor.u32 %v260, 2147483648
        %v277 = vmul.f32 %v261, 1.442695
        %v278 = vpow.pop %v277
        %v279 = vmul.f32 %v262, 1.442695
        %v280 = vpow.pop %v279
        %v281 = vmul.f32 %v263, 1.442695
        %v282 = vpow.pop %v281
        %v283 = vmul.f32 %v264, 1.442695
        %v284 = vpow.pop %v283
        %v285 = vmul.f32 %v265, 1.442695
        %v286 = vpow.pop %v285
        %v287 = vmul.f32 %v266, 1.442695
        %v288 = vpow.pop %v287
        %v289 = vmul.f32 %v267, 1.442695
        %v290 = vpow.pop %v289
        %v291 = vmul.f32 %v268, 1.442695
        %v292 = vpow.pop %v291
        %v293 = vmul.f32 %v269, 1.442695
        %v294 = vpow.pop %v293
        %v295 = vmul.f32 %v270, 1.442695
        %v296 = vpow.pop %v295
        %v297 = vmul.f32 %v271, 1.442695
        %v298 = vpow.pop %v297
        %v299 = vmul.f32 %v272, 1.442695
        %v300 = vpow.pop %v299
        %v301 = vmul.f32 %v273, 1.442695
        %v302 = vpow.pop %v301
        %v303 = vmul.f32 %v274, 1.442695
        %v304 = vpow.pop %v303
        %v305 = vmul.f32 %v275, 1.442695
        %v306 = vpow.pop %v305
        %v307 = vmul.f32 %v276, 1.442695
        %v308 = vpow.pop %v307
        %v309 = vadd.f32 %v278, 1.0
        %v310 = vadd.f32 %v280, 1.0
        %v311 = vadd.f32 %v282, 1.0
        %v312 = vadd.f32 %v284, 1.0
        %v313 = vadd.f32 %v286, 1.0
        %v314 = vadd.f32 %v288, 1.0
        %v315 = vadd.f32 %v290, 1.0
        %v316 = vadd.f32 %v292, 1.0
        %v317 = vadd.f32 %v294, 1.0
        %v318 = vadd.f32 %v296, 1.0
        %v319 = vadd.f32 %v298, 1.0
        %v320 = vadd.f32 %v300, 1.0
        %v321 = vadd.f32 %v302, 1.0
        %v322 = vadd.f32 %v304, 1.0
        %v323 = vadd.f32 %v306, 1.0
        %v324 = vadd.f32 %v308, 1.0
        %v325 = vrcp.pop %v309
        %v326 = vmul.f32 1.0, %v325
        %v327 = vrcp.pop %v310
        %v328 = vmul.f32 1.0, %v327
        %v329 = vrcp.pop %v311
        %v330 = vmul.f32 1.0, %v329
        %v331 = vrcp.pop %v312
        %v332 = vmul.f32 1.0, %v331
        %v333 = vrcp.pop %v313
        %v334 = vmul.f32 1.0, %v333
        %v335 = vrcp.pop %v314
        %v336 = vmul.f32 1.0, %v335
        %v337 = vrcp.pop %v315
        %v338 = vmul.f32 1.0, %v337
        %v339 = vrcp.pop %v316
        %v340 = vmul.f32 1.0, %v339
        %v341 = vrcp.pop %v317
        %v342 = vmul.f32 1.0, %v341
        %v343 = vrcp.pop %v318
        %v344 = vmul.f32 1.0, %v343
        %v345 = vrcp.pop %v319
        %v346 = vmul.f32 1.0, %v345
        %v347 = vrcp.pop %v320
        %v348 = vmul.f32 1.0, %v347
        %v349 = vrcp.pop %v321
        %v350 = vmul.f32 1.0, %v349
        %v351 = vrcp.pop %v322
        %v352 = vmul.f32 1.0, %v351
        %v353 = vrcp.pop %v323
        %v354 = vmul.f32 1.0, %v353
        %v355 = vrcp.pop %v324
        %v356 = vmul.f32 1.0, %v355
        %357 = vst [vmem:[%s174] sm:$0xff] %v326
        %358 = vst [vmem:[%s174 + $0x8] sm:$0xff] %v328
        %359 = vst [vmem:[%s174 + $0x10] sm:$0xff] %v330
        %360 = vst [vmem:[%s174 + $0x18] sm:$0xff] %v332
        %361 = vst [vmem:[%s174 + $0x20] sm:$0xff] %v334
        %362 = vst [vmem:[%s174 + $0x28] sm:$0xff] %v336
        %363 = vst [vmem:[%s174 + $0x30] sm:$0xff] %v338
        %364 = vst [vmem:[%s174 + $0x38] sm:$0xff] %v340
        %365 = vst [vmem:[%s174 + $0x40] sm:$0xff] %v342
        %366 = vst [vmem:[%s174 + $0x48] sm:$0xff] %v344
        %367 = vst [vmem:[%s174 + $0x50] sm:$0xff] %v346
        %368 = vst [vmem:[%s174 + $0x58] sm:$0xff] %v348
        %369 = vst [vmem:[%s174 + $0x60] sm:$0xff] %v350
        %370 = vst [vmem:[%s174 + $0x68] sm:$0xff] %v352
        %371 = vst [vmem:[%s174 + $0x70] sm:$0xff] %v354
        %372 = vst [vmem:[%s174 + $0x78] sm:$0xff] %v356
        %s373 = sand.u32 %s75, 1
        %s374 = scalar_lea.sflag [#allocation4], %s373
        %s375 = sand.u32 %s75, 1
        %s376 = smul.addr %s375, 128
        %s377 = scalar_lea.vmem [#allocation7], %s376
        // Predicated region
        $region37: #{tpu_custom_call.1} parent=27 // pred_check
          %p378 = pneg %p85
        $region38: #{tpu_custom_call.1} parent=27 // pred_check_branch
          %380 = sbr.rel (%p378) target = $region40
        $region39: #{tpu_custom_call.1} parent=27 // pred_region
          %s381 = smul.u32 8, %s20
          %s383 = ssub.s32 2048, 2048
          %384 = vsyncadd %s374, %s383
          %s385 = smul.addr %s381, 2
          %s386 = smul.addr %s385, 128
          %s387 = scalar_lea.hbm %s2, %s386
          %s388 = sshll.u32 %s377, 4
          %s389 = int_to_ptr.vmem [resolvable:$true] %s388
          %394 = dma.vmem_to_hbm [thread:$0]  %s389, 2048, %s387, %s374, 256, 256, 16
        $region40: #{tpu_custom_call.1} parent=27 // pred_fallthru
          _
      $region28: #{tpu_custom_call.1} parent=5 // pred_fallthru
        _
      %p395 = scmp.le.s32.totalorder 2, %s15
      // Predicated region
      $region41: #{tpu_custom_call.1} parent=5 // pred_check
        %p396 = pneg %p395
      $region42: #{tpu_custom_call.1} parent=5 // pred_check_branch
        %398 = sbr.rel (%p396) target = $region44
      $region43: #{tpu_custom_call.1} parent=5 // pred_region
        %s399 = ssub.s32 %s15, 2
        // Predicated region
        $region45: #{tpu_custom_call.1} parent=43 // pred_check
          %p400 = pneg %p91
        $region46: #{tpu_custom_call.1} parent=43 // pred_check_branch
          %402 = sbr.rel (%p400) target = $region48
        $region47: #{tpu_custom_call.1} parent=43 // pred_region
          %s403 = sand.u32 %s76, 1
          %s404 = scalar_lea.sflag [#allocation4], %s403
          %s405 = sand.u32 %s76, 1
          %s406 = smul.addr %s405, 128
          %s407 = scalar_lea.vmem [#allocation7], %s406
          %408 = dma.done %s404, 2048
        $region48: #{tpu_custom_call.1} parent=43 // pred_fallthru
          _
      $region44: #{tpu_custom_call.1} parent=5 // pred_fallthru
        _
    $region6: #{tpu_custom_call.1} parent=1 // loop_footer
      %s19 = sadd.s32 1, %s15
    $region7: #{tpu_custom_call.1} parent=1 // loop_footer_branch
      %14 = sbr.rel target = $region3
    $region8: #{tpu_custom_call.1} parent=1 // loop_exit
      _
    %409 = vsyncpa [#allocation3], 1
    %s410 = scalar_lea.sflag [#allocation3], 1
    %411 = vsyncpa %s410, 1
    %412 = vsyncpa [#allocation4], 1
    %s413 = scalar_lea.sflag [#allocation4], 1
    %414 = vsyncpa %s413, 1
    %415 = vsyncpa [#allocation5], 1
    %s416 = scalar_lea.sflag [#allocation5], 1
    %417 = vsyncpa %s416, 1

</llo_original>
